<compile_context>
chip_gen: v7x
topology: tpu7x:2x2x1
jax: 0.10.0
libtpu: 0.0.40
codegen_flags: <defaults>
</compile_context>

<pallas_src>
import functools

import jax
import jax.numpy as jnp
from jax.experimental import pallas as pl
from jax.experimental.pallas import tpu as pltpu

_LANES = 128
_MAX_TILE_ROWS = 1024  # 1024x128 f32 tile = 512 KiB per stream per buffer


def _row_align(*dtypes):
    # sublane packing: 32-bit -> 8 rows, 16-bit -> 16 rows, 8-bit -> 32 rows
    return max(max(8, 32 // jnp.dtype(d).itemsize) for d in dtypes)


def _padded_rows(n_elems, align):
    rows = -(-n_elems // _LANES)
    return -(-rows // align) * align


def _lane_dense(x, rows):
    """Flatten x, zero-pad to rows*128 elements, reshape to (rows, 128)."""
    flat = jnp.ravel(x)
    pad = rows * _LANES - flat.shape[0]
    flat = jnp.pad(flat, (0, pad))
    return flat.reshape(rows, _LANES)


def _dnn_loss_kernel(mel_ref, post_ref, tgt_ref, dur_p_ref, dur_t_ref,
                     mel_loss_ref, post_loss_ref, dur_loss_ref,
                     acc_mel_ref, acc_post_ref,
                     *, inv_n_mel, inv_n_dur):
    i = pl.program_id(0)

    @pl.when(i == 0)
    def _init():
        acc_mel_ref[...] = jnp.zeros_like(acc_mel_ref)
        acc_post_ref[...] = jnp.zeros_like(acc_post_ref)

    # Hot loop: pure VPU elementwise work, lane-dense, accumulate into full-tile
    # scratch (no per-iteration XLU reduction / scalar store).
    tgt = tgt_ref[...].astype(jnp.float32)
    d0 = mel_ref[...].astype(jnp.float32) - tgt
    d1 = post_ref[...].astype(jnp.float32) - tgt
    acc_mel_ref[...] += d0 * d0
    acc_post_ref[...] += d1 * d1

    @pl.when(i == pl.num_programs(0) - 1)
    def _finalize():
        # Single cross-lane/sublane reduction per loss; divide by TRUE counts.
        mel_loss_ref[0] = jnp.sum(acc_mel_ref[...]) * inv_n_mel
        post_loss_ref[0] = jnp.sum(acc_post_ref[...]) * inv_n_mel
        dp = dur_p_ref[...].astype(jnp.float32)
        dt = dur_t_ref[...].astype(jnp.float32)  # matches .float() in PyTorch
        dur_loss_ref[0] = jnp.sum(jnp.abs(dp - dt)) * inv_n_dur


def dnn_loss(mel, mel_postnet, duration_predicted, mel_target,
             duration_predictor_target):
    """Pallas implementation of DNNLoss.forward. Returns 3 scalar losses."""
    n_mel = mel.size
    n_dur = duration_predicted.size

    mel_align = _row_align(mel.dtype, mel_postnet.dtype, mel_target.dtype)
    dur_align = _row_align(duration_predicted.dtype,
                           duration_predictor_target.dtype)

    tile_rows = min(_MAX_TILE_ROWS, _padded_rows(n_mel, mel_align))
    mel_rows = -(-_padded_rows(n_mel, mel_align) // tile_rows) * tile_rows
    dur_rows = _padded_rows(n_dur, dur_align)

    # Lane-dense, zero-padded slabs (padding contributes 0 to every sum).
    mel2 = _lane_dense(mel, mel_rows)
    post2 = _lane_dense(mel_postnet, mel_rows)
    tgt2 = _lane_dense(mel_target, mel_rows)
    dur_p2 = _lane_dense(duration_predicted, dur_rows)
    dur_t2 = _lane_dense(duration_predictor_target, dur_rows)

    grid = (mel_rows // tile_rows,)

    mel_spec = pl.BlockSpec((tile_rows, _LANES), lambda i: (i, 0))
    dur_spec = pl.BlockSpec((dur_rows, _LANES), lambda i: (0, 0))  # resident
    scalar_out = pl.BlockSpec(memory_space=pltpu.MemorySpace.SMEM)

    kernel = functools.partial(_dnn_loss_kernel,
                               inv_n_mel=1.0 / float(n_mel),
                               inv_n_dur=1.0 / float(n_dur))

    bytes_in = (mel2.size * mel2.dtype.itemsize
                + post2.size * post2.dtype.itemsize
                + tgt2.size * tgt2.dtype.itemsize
                + dur_p2.size * dur_p2.dtype.itemsize
                + dur_t2.size * dur_t2.dtype.itemsize)
    cost = pl.CostEstimate(flops=6 * n_mel + 2 * n_dur,
                           transcendentals=0,
                           bytes_accessed=bytes_in + 3 * 4)

    mel_loss, post_loss, dur_loss = pl.pallas_call(
        kernel,
        out_shape=(
            jax.ShapeDtypeStruct((1,), jnp.float32),
            jax.ShapeDtypeStruct((1,), jnp.float32),
            jax.ShapeDtypeStruct((1,), jnp.float32),
        ),
        grid=grid,
        in_specs=[mel_spec, mel_spec, mel_spec, dur_spec, dur_spec],
        out_specs=(scalar_out, scalar_out, scalar_out),
        scratch_shapes=[pltpu.VMEM((tile_rows, _LANES), jnp.float32),
                        pltpu.VMEM((tile_rows, _LANES), jnp.float32)],
        compiler_params=pltpu.CompilerParams(
            dimension_semantics=("arbitrary",),   # reduction over the grid axis
            vmem_limit_bytes=32 * 1024 * 1024),
        cost_estimate=cost,
    )(mel2, post2, tgt2, dur_p2, dur_t2)

    return mel_loss[0], post_loss[0], dur_loss[0]


if __name__ == "__main__":
    key = jax.random.PRNGKey(0)
    k1, k2, k3, k4, k5 = jax.random.split(key, 5)

    B, T, M = 2, 8, 32  # batch, frames, mel bins

    mel = jax.random.normal(k1, (B, T, M), dtype=jnp.float32)
    mel_postnet = jax.random.normal(k2, (B, T, M), dtype=jnp.float32)
    mel_target = jax.random.normal(k3, (B, T, M), dtype=jnp.float32)
    duration_predicted = jax.random.normal(k4, (B, T), dtype=jnp.float32)
    # duration target arrives as integer counts in FastSpeech; cast happens in-kernel
    duration_predictor_target = jax.random.randint(k5, (B, T), 0, 10, dtype=jnp.int32)

    losses = dnn_loss(mel, mel_postnet, duration_predicted,
                      mel_target, duration_predictor_target)
    losses = jax.block_until_ready(losses)
    mel_loss, mel_post_loss, dur_loss = losses

    # Pure-JAX reference check (same semantics as the PyTorch module)
    ref_mel = jnp.mean((mel - mel_target) ** 2)
    ref_post = jnp.mean((mel_postnet - mel_target) ** 2)
    ref_dur = jnp.mean(jnp.abs(duration_predicted
                               - duration_predictor_target.astype(jnp.float32)))

    assert jnp.allclose(mel_loss, ref_mel, rtol=1e-5, atol=1e-6)
    assert jnp.allclose(mel_post_loss, ref_post, rtol=1e-5, atol=1e-6)
    assert jnp.allclose(dur_loss, ref_dur, rtol=1e-5, atol=1e-6)

    print("KERNEL_OK")
</pallas_src>

<mosaic_0001>
module attributes {stable_mosaic.version = 11 : i64} {
  func.func @_dnn_loss_kernel(%arg0: i32, %arg1: memref<8x128xf32, #tpu.memory_space<vmem>>, %arg2: memref<8x128xf32, #tpu.memory_space<vmem>>, %arg3: memref<8x128xf32, #tpu.memory_space<vmem>>, %arg4: memref<8x128xf32, #tpu.memory_space<vmem>>, %arg5: memref<8x128xi32, #tpu.memory_space<vmem>>, %arg6: memref<1xf32, #tpu.memory_space<smem>>, %arg7: memref<1xf32, #tpu.memory_space<smem>>, %arg8: memref<1xf32, #tpu.memory_space<smem>>, %arg9: memref<8x128xf32, #tpu.memory_space<vmem>>, %arg10: memref<8x128xf32, #tpu.memory_space<vmem>>) attributes {dimension_semantics = [#tpu.dimension_semantics<arbitrary>], iteration_bounds = array<i64: 1>, scalar_prefetch = 0 : i64, scratch_operands = 2 : i64, tpu.core_type = #tpu.core_type<tc>, window_params = [{transform_indices = @transform_0, window_bounds = array<i64: 8, 128>}, {transform_indices = @transform_1, window_bounds = array<i64: 8, 128>}, {transform_indices = @transform_2, window_bounds = array<i64: 8, 128>}, {pipeline_mode = #tpu.pipeline_mode<synchronous>, transform_indices = @transform_3, window_bounds = array<i64: 8, 128>}, {pipeline_mode = #tpu.pipeline_mode<synchronous>, transform_indices = @transform_4, window_bounds = array<i64: 8, 128>}, {transform_indices = @transform_5, window_bounds = array<i64: 1>}, {transform_indices = @transform_6, window_bounds = array<i64: 1>}, {transform_indices = @transform_7, window_bounds = array<i64: 1>}]} {
    %c0_i32 = arith.constant 0 : i32
    %0 = arith.cmpi eq, %arg0, %c0_i32 : i32
    %1 = arith.extui %0 : i1 to i32
    %c0_i32_0 = arith.constant 0 : i32
    %2 = arith.cmpi ne, %1, %c0_i32_0 : i32
    scf.if %2 {
      %cst = arith.constant 0.000000e+00 : f32
      %19 = vector.broadcast %cst : f32 to vector<8x128xf32>
      %c0_16 = arith.constant 0 : index
      %c0_17 = arith.constant 0 : index
      %20 = vector.load %arg9[%c0_16, %c0_17] : memref<8x128xf32, #tpu.memory_space<vmem>>, vector<8x128xf32>
      tpu.vector_store %arg9[%c0_16, %c0_17], %19 {strides = array<i32>} : memref<8x128xf32, #tpu.memory_space<vmem>>, vector<8x128xf32>,
      %cst_18 = arith.constant 0.000000e+00 : f32
      %21 = vector.broadcast %cst_18 : f32 to vector<8x128xf32>
      %c0_19 = arith.constant 0 : index
      %c0_20 = arith.constant 0 : index
      %22 = vector.load %arg10[%c0_19, %c0_20] : memref<8x128xf32, #tpu.memory_space<vmem>>, vector<8x128xf32>
      tpu.vector_store %arg10[%c0_19, %c0_20], %21 {strides = array<i32>} : memref<8x128xf32, #tpu.memory_space<vmem>>, vector<8x128xf32>,
    } else {
    }
    %c0 = arith.constant 0 : index
    %c0_1 = arith.constant 0 : index
    %3 = vector.load %arg3[%c0, %c0_1] : memref<8x128xf32, #tpu.memory_space<vmem>>, vector<8x128xf32>
    %c0_2 = arith.constant 0 : index
    %c0_3 = arith.constant 0 : index
    %4 = vector.load %arg1[%c0_2, %c0_3] : memref<8x128xf32, #tpu.memory_space<vmem>>, vector<8x128xf32>
    %5 = arith.subf %4, %3 : vector<8x128xf32>
    %c0_4 = arith.constant 0 : index
    %c0_5 = arith.constant 0 : index
    %6 = vector.load %arg2[%c0_4, %c0_5] : memref<8x128xf32, #tpu.memory_space<vmem>>, vector<8x128xf32>
    %7 = arith.subf %6, %3 : vector<8x128xf32>
    %c0_6 = arith.constant 0 : index
    %c0_7 = arith.constant 0 : index
    %8 = vector.load %arg9[%c0_6, %c0_7] : memref<8x128xf32, #tpu.memory_space<vmem>>, vector<8x128xf32>
    %9 = arith.mulf %5, %5 : vector<8x128xf32>
    %10 = arith.addf %8, %9 : vector<8x128xf32>
    %c0_8 = arith.constant 0 : index
    %c0_9 = arith.constant 0 : index
    %11 = vector.load %arg9[%c0_8, %c0_9] : memref<8x128xf32, #tpu.memory_space<vmem>>, vector<8x128xf32>
    tpu.vector_store %arg9[%c0_8, %c0_9], %10 {strides = array<i32>} : memref<8x128xf32, #tpu.memory_space<vmem>>, vector<8x128xf32>,
    %c0_10 = arith.constant 0 : index
    %c0_11 = arith.constant 0 : index
    %12 = vector.load %arg10[%c0_10, %c0_11] : memref<8x128xf32, #tpu.memory_space<vmem>>, vector<8x128xf32>
    %13 = arith.mulf %7, %7 : vector<8x128xf32>
    %14 = arith.addf %12, %13 : vector<8x128xf32>
    %c0_12 = arith.constant 0 : index
    %c0_13 = arith.constant 0 : index
    %15 = vector.load %arg10[%c0_12, %c0_13] : memref<8x128xf32, #tpu.memory_space<vmem>>, vector<8x128xf32>
    tpu.vector_store %arg10[%c0_12, %c0_13], %14 {strides = array<i32>} : memref<8x128xf32, #tpu.memory_space<vmem>>, vector<8x128xf32>,
    %c0_i32_14 = arith.constant 0 : i32
    %16 = arith.cmpi eq, %arg0, %c0_i32_14 : i32
    %17 = arith.extui %16 : i1 to i32
    %c0_i32_15 = arith.constant 0 : i32
    %18 = arith.cmpi ne, %17, %c0_i32_15 : i32
    scf.if %18 {
      %c0_16 = arith.constant 0 : index
      %c0_17 = arith.constant 0 : index
      %19 = vector.load %arg9[%c0_16, %c0_17] : memref<8x128xf32, #tpu.memory_space<vmem>>, vector<8x128xf32>
      %20 = vector.shape_cast %19 : vector<8x128xf32> to vector<1x8x128xf32>
      %cst = arith.constant dense<0.000000e+00> : vector<1xf32>
      %21 = vector.multi_reduction <add>, %20, %cst [1, 2] : vector<1x8x128xf32> to vector<1xf32>
      %22 = vector.shape_cast %21 : vector<1xf32> to vector<1x1x1xf32>
      %23 = vector.extract %22[0, 0, 0] : f32 from vector<1x1x1xf32>
      %cst_18 = arith.constant 0.001953125 : f32
      %24 = arith.mulf %23, %cst_18 : f32
      %c0_19 = arith.constant 0 : index
      %25 = memref.load %arg6[%c0_19] : memref<1xf32, #tpu.memory_space<smem>>
      memref.store %24, %arg6[%c0_19] : memref<1xf32, #tpu.memory_space<smem>>
      %c0_20 = arith.constant 0 : index
      %c0_21 = arith.constant 0 : index
      %26 = vector.load %arg10[%c0_20, %c0_21] : memref<8x128xf32, #tpu.memory_space<vmem>>, vector<8x128xf32>
      %27 = vector.shape_cast %26 : vector<8x128xf32> to vector<1x8x128xf32>
      %cst_22 = arith.constant dense<0.000000e+00> : vector<1xf32>
      %28 = vector.multi_reduction <add>, %27, %cst_22 [1, 2] : vector<1x8x128xf32> to vector<1xf32>
      %29 = vector.shape_cast %28 : vector<1xf32> to vector<1x1x1xf32>
      %30 = vector.extract %29[0, 0, 0] : f32 from vector<1x1x1xf32>
      %cst_23 = arith.constant 0.001953125 : f32
      %31 = arith.mulf %30, %cst_23 : f32
      %c0_24 = arith.constant 0 : index
      %32 = memref.load %arg7[%c0_24] : memref<1xf32, #tpu.memory_space<smem>>
      memref.store %31, %arg7[%c0_24] : memref<1xf32, #tpu.memory_space<smem>>
      %c0_25 = arith.constant 0 : index
      %c0_26 = arith.constant 0 : index
      %33 = vector.load %arg4[%c0_25, %c0_26] : memref<8x128xf32, #tpu.memory_space<vmem>>, vector<8x128xf32>
      %c0_27 = arith.constant 0 : index
      %c0_28 = arith.constant 0 : index
      %34 = vector.load %arg5[%c0_27, %c0_28] : memref<8x128xi32, #tpu.memory_space<vmem>>, vector<8x128xi32>
      %35 = arith.sitofp %34 : vector<8x128xi32> to vector<8x128xf32>
      %36 = arith.subf %33, %35 : vector<8x128xf32>
      %37 = math.absf %36 : vector<8x128xf32>
      %38 = vector.shape_cast %37 : vector<8x128xf32> to vector<1x8x128xf32>
      %cst_29 = arith.constant dense<0.000000e+00> : vector<1xf32>
      %39 = vector.multi_reduction <add>, %38, %cst_29 [1, 2] : vector<1x8x128xf32> to vector<1xf32>
      %40 = vector.shape_cast %39 : vector<1xf32> to vector<1x1x1xf32>
      %41 = vector.extract %40[0, 0, 0] : f32 from vector<1x1x1xf32>
      %cst_30 = arith.constant 6.250000e-02 : f32
      %42 = arith.mulf %41, %cst_30 : f32
      %c0_31 = arith.constant 0 : index
      %43 = memref.load %arg8[%c0_31] : memref<1xf32, #tpu.memory_space<smem>>
      memref.store %42, %arg8[%c0_31] : memref<1xf32, #tpu.memory_space<smem>>
    } else {
    }
    return
  }
  func.func @transform_0(%arg0: i32) -> (i32, i32) {
    %c0_i32 = arith.constant 0 : i32
    %c0_i32_0 = arith.constant 0 : i32
    return %arg0, %c0_i32 : i32, i32
  }
  func.func @transform_1(%arg0: i32) -> (i32, i32) {
    %c0_i32 = arith.constant 0 : i32
    %c0_i32_0 = arith.constant 0 : i32
    return %arg0, %c0_i32 : i32, i32
  }
  func.func @transform_2(%arg0: i32) -> (i32, i32) {
    %c0_i32 = arith.constant 0 : i32
    %c0_i32_0 = arith.constant 0 : i32
    return %arg0, %c0_i32 : i32, i32
  }
  func.func @transform_3(%arg0: i32) -> (i32, i32) {
    %c0_i32 = arith.constant 0 : i32
    %c0_i32_0 = arith.constant 0 : i32
    %c0_i32_1 = arith.constant 0 : i32
    return %c0_i32, %c0_i32_0 : i32, i32
  }
  func.func @transform_4(%arg0: i32) -> (i32, i32) {
    %c0_i32 = arith.constant 0 : i32
    %c0_i32_0 = arith.constant 0 : i32
    %c0_i32_1 = arith.constant 0 : i32
    return %c0_i32, %c0_i32_0 : i32, i32
  }
  func.func @transform_5(%arg0: i32) -> i32 {
    %c0_i32 = arith.constant 0 : i32
    %c0_i32_0 = arith.constant 0 : i32
    return %c0_i32 : i32
  }
  func.func @transform_6(%arg0: i32) -> i32 {
    %c0_i32 = arith.constant 0 : i32
    %c0_i32_0 = arith.constant 0 : i32
    return %c0_i32 : i32
  }
  func.func @transform_7(%arg0: i32) -> i32 {
    %c0_i32 = arith.constant 0 : i32
    %c0_i32_0 = arith.constant 0 : i32
    return %c0_i32 : i32
  }
}

</mosaic_0001>

<llo_original>
// kernel: tpu_custom_call.1
$region0: #{tpu_custom_call.1}
  #allocation0 [shape = 'u32[]', space=smem, size = 0x4, offset = 0x4, fixed_abs, tag = 'smem constant byte address 0x4 - core index']
  #allocation1 [shape = 'u32[144,128]{1,0:T(1,128)}', space=vmem, size = 0x12000, scoped, tag = 'internal scratch']
  #allocation2 [shape = 'f32[8,128]{1,0:T(8,128)}', space=vmem, size = 0x1000, scoped, tag = 'scratch operand']
  #allocation3 [shape = 'f32[8,128]{1,0:T(8,128)}', space=vmem, size = 0x1000, scoped, tag = 'scratch operand']
  %s0 = inlined_call_operand.hbm [shape: f32[8,128], index: 0, kind: input, shape index: {}]
  %s1 = inlined_call_operand.hbm [shape: f32[8,128], index: 1, kind: input, shape index: {}]
  %s2 = inlined_call_operand.hbm [shape: f32[8,128], index: 2, kind: input, shape index: {}]
  %s3 = inlined_call_operand.vmem [shape: f32[8,128], index: 3, kind: input, shape index: {}]
  %s4 = inlined_call_operand.hbm [shape: s32[8,128], index: 4, kind: input, shape index: {}]
  %s5 = inlined_call_operand.hbm [shape: f32[1], index: 5, kind: output, shape index: {0}]
  %s6 = inlined_call_operand.hbm [shape: f32[1], index: 6, kind: output, shape index: {1}]
  %s7 = inlined_call_operand.hbm [shape: f32[1], index: 7, kind: output, shape index: {2}]
  %8 = xla_tuple %s5, %s6, %s7
  %s9 = sld [smem:[#allocation0]]
  $region70: #{tpu_custom_call.1} parent=0
    _
  %s11 = ssub.s32 1, %s9
  %s12 = scalar_select 0, %s11, %s9
  $region1: #{tpu_custom_call.1} parent=0
    #allocation4 [shape = 'u8[4096]{0}', space=vmem, size = 0x1000, scoped, tag = 'input window, operand 0, single buffered']
    #allocation5 [shape = 's32[1]{0}', space=sflag, size = 0x4, scoped, tag = 'scoped memory for tpu_custom_call.1']
    #allocation6 [shape = 's32[1]{0}', space=sflag, size = 0x4, scoped, tag = 'scoped memory for tpu_custom_call.1']
    #allocation7 [shape = 'u8[4096]{0}', space=vmem, size = 0x1000, scoped, tag = 'input window, operand 1, single buffered']
    #allocation8 [shape = 's32[1]{0}', space=sflag, size = 0x4, scoped, tag = 'scoped memory for tpu_custom_call.1']
    #allocation9 [shape = 'u8[4096]{0}', space=vmem, size = 0x1000, scoped, tag = 'input window, operand 2, single buffered']
    #allocation10 [shape = 'u8[4096]{0}', space=vmem, size = 0x1000, scoped, tag = 'input window, operand 4, single buffered']
    #allocation11 [shape = 's32[1]{0}', space=sflag, size = 0x4, scoped, tag = 'scoped memory for tpu_custom_call.1']
    #allocation12 [shape = 'u8[512]{0}', space=smem, size = 0x200, scoped, tag = 'output window, operand 0, single buffered']
    #allocation13 [shape = 'u8[512]{0}', space=smem, size = 0x200, scoped, tag = 'output window, operand 1, single buffered']
    #allocation14 [shape = 's32[1]{0}', space=sflag, size = 0x4, scoped, tag = 'scoped memory for tpu_custom_call.1']
    #allocation15 [shape = 'u8[512]{0}', space=smem, size = 0x200, scoped, tag = 'output window, operand 2, single buffered']
    %13 = vsyncpa [#allocation5], 0
    %14 = vsyncpa [#allocation8], 0
    %15 = vsyncpa [#allocation11], 0
    %16 = vsyncpa [#allocation6], 0
    %17 = vsyncpa [#allocation14], 0
    // Predicated region
    $region2: #{tpu_custom_call.1} parent=1 // pred_check
      _
    $region3: #{tpu_custom_call.1} parent=1 // pred_check_branch
      %19 = sbr.rel (0) target = $region5
    $region4: #{tpu_custom_call.1} parent=1 // pred_region
      %s21 = ssub.s32 128, 128
      %22 = vsyncadd [#allocation5], %s21
      %s24 = sshll.u32 [#allocation4], 4
      %s25 = int_to_ptr.vmem [resolvable:$true] %s24
      %27 = dma.hbm_to_vmem [thread:$0]  %s0, 128, %s25, [#allocation5]
    $region5: #{tpu_custom_call.1} parent=1 // pred_fallthru
      _
    // Predicated region
    $region6: #{tpu_custom_call.1} parent=1 // pred_check
      _
    $region7: #{tpu_custom_call.1} parent=1 // pred_check_branch
      %29 = sbr.rel (0) target = $region9
    $region8: #{tpu_custom_call.1} parent=1 // pred_region
      %s31 = ssub.s32 128, 128
      %32 = vsyncadd [#allocation8], %s31
      %s34 = sshll.u32 [#allocation7], 4
      %s35 = int_to_ptr.vmem [resolvable:$true] %s34
      %37 = dma.hbm_to_vmem [thread:$0]  %s1, 128, %s35, [#allocation8]
    $region9: #{tpu_custom_call.1} parent=1 // pred_fallthru
      _
    // Predicated region
    $region10: #{tpu_custom_call.1} parent=1 // pred_check
      _
    $region11: #{tpu_custom_call.1} parent=1 // pred_check_branch
      %39 = sbr.rel (0) target = $region13
    $region12: #{tpu_custom_call.1} parent=1 // pred_region
      %s41 = ssub.s32 128, 128
      %42 = vsyncadd [#allocation8], %s41
      %s44 = sshll.u32 [#allocation9], 4
      %s45 = int_to_ptr.vmem [resolvable:$true] %s44
      %47 = dma.hbm_to_vmem [thread:$0]  %s2, 128, %s45, [#allocation8]
    $region13: #{tpu_custom_call.1} parent=1 // pred_fallthru
      _
    // Predicated region
    $region14: #{tpu_custom_call.1} parent=1 // pred_check
      _
    $region15: #{tpu_custom_call.1} parent=1 // pred_check_branch
      %49 = sbr.rel (0) target = $region17
    $region16: #{tpu_custom_call.1} parent=1 // pred_region
      _
    $region17: #{tpu_custom_call.1} parent=1 // pred_fallthru
      _
    // Predicated region
    $region18: #{tpu_custom_call.1} parent=1 // pred_check
      _
    $region19: #{tpu_custom_call.1} parent=1 // pred_check_branch
      %51 = sbr.rel (0) target = $region21
    $region20: #{tpu_custom_call.1} parent=1 // pred_region
      %s53 = ssub.s32 128, 128
      %54 = vsyncadd [#allocation11], %s53
      %s56 = sshll.u32 [#allocation10], 4
      %s57 = int_to_ptr.vmem [resolvable:$true] %s56
      %59 = dma.hbm_to_vmem [thread:$0]  %s4, 128, %s57, [#allocation11]
    $region21: #{tpu_custom_call.1} parent=1 // pred_fallthru
      _
    // Predicated region
    $region22: #{tpu_custom_call.1} parent=1 // pred_check
      _
    $region23: #{tpu_custom_call.1} parent=1 // pred_check_branch
      %61 = sbr.rel (0) target = $region25
    $region24: #{tpu_custom_call.1} parent=1 // pred_region
      %62 = dma.done [#allocation5], 128
    $region25: #{tpu_custom_call.1} parent=1 // pred_fallthru
      _
    // Predicated region
    $region26: #{tpu_custom_call.1} parent=1 // pred_check
      _
    $region27: #{tpu_custom_call.1} parent=1 // pred_check_branch
      %64 = sbr.rel (0) target = $region29
    $region28: #{tpu_custom_call.1} parent=1 // pred_region
      %65 = dma.done [#allocation8], 128
    $region29: #{tpu_custom_call.1} parent=1 // pred_fallthru
      _
    // Predicated region
    $region30: #{tpu_custom_call.1} parent=1 // pred_check
      _
    $region31: #{tpu_custom_call.1} parent=1 // pred_check_branch
      %67 = sbr.rel (0) target = $region33
    $region32: #{tpu_custom_call.1} parent=1 // pred_region
      %68 = dma.done [#allocation8], 128
    $region33: #{tpu_custom_call.1} parent=1 // pred_fallthru
      _
    // Predicated region
    $region34: #{tpu_custom_call.1} parent=1 // pred_check
      _
    $region35: #{tpu_custom_call.1} parent=1 // pred_check_branch
      %70 = sbr.rel (0) target = $region37
    $region36: #{tpu_custom_call.1} parent=1 // pred_region
      %71 = dma.done [#allocation11], 128
    $region37: #{tpu_custom_call.1} parent=1 // pred_fallthru
      _
    %p72 = scmp.eq.s32.totalorder 0, 0
    // Predicated region
    $region38: #{tpu_custom_call.1} parent=1 // pred_check
      %p73 = pneg %p72
    $region39: #{tpu_custom_call.1} parent=1 // pred_check_branch
      %75 = sbr.rel (%p73) target = $region41
    $region40: #{tpu_custom_call.1} parent=1 // pred_region
      %76 = vst [vmem:[#allocation2] sm:$0xff] 0.0
      %77 = vst [vmem:[#allocation3] sm:$0xff] 0.0
    $region41: #{tpu_custom_call.1} parent=1 // pred_fallthru
      _
    %v78 = vld [vmem:[#allocation9] sm:$0xff]
    %v79 = vld [vmem:[#allocation4] sm:$0xff]
    %v80 = vsub.f32 %v79, %v78
    %v81 = vld [vmem:[#allocation7] sm:$0xff]
    %v82 = vsub.f32 %v81, %v78
    %v83 = vld [vmem:[#allocation2] sm:$0xff]
    %v84 = vmul.f32 %v80, %v80
    %v85 = vadd.f32 %v83, %v84
    %86 = vst [vmem:[#allocation2] sm:$0xff] %v85
    %v87 = vld [vmem:[#allocation3] sm:$0xff]
    %v88 = vmul.f32 %v82, %v82
    %v89 = vadd.f32 %v87, %v88
    %90 = vst [vmem:[#allocation3] sm:$0xff] %v89
    // Predicated region
    $region42: #{tpu_custom_call.1} parent=1 // pred_check
      %p91 = pneg %p72
    $region43: #{tpu_custom_call.1} parent=1 // pred_check_branch
      %93 = sbr.rel (%p91) target = $region45
    $region44: #{tpu_custom_call.1} parent=1 // pred_region
      %v94 = vld [vmem:[#allocation2] sm:$0xff]
      %95 = vadd.xlane.f32.xlu0 %v94
      %v96 = vpop.xlane.xlu0 %95
      %v97 = vrot.slane %v96, 4
      %v98 = vadd.f32 %v96, %v97
      %v99 = vrot.slane %v98, 2
      %v100 = vadd.f32 %v98, %v99
      %v101 = vrot.slane %v100, 1
      %v102 = vadd.f32 %v100, %v101
      %s103 = vtos %v102
      %s104 = smul.f32 %s103, 0.001953125
      %s105 = scalar_lea.smem [#allocation12], 0
      %106 = sst [smem:[%s105]] %s104
      %v107 = vld [vmem:[#allocation3] sm:$0xff]
      %108 = vadd.xlane.f32.xlu0 %v107
      %v109 = vpop.xlane.xlu0 %108
      %v110 = vrot.slane %v109, 4
      %v111 = vadd.f32 %v109, %v110
      %v112 = vrot.slane %v111, 2
      %v113 = vadd.f32 %v111, %v112
      %v114 = vrot.slane %v113, 1
      %v115 = vadd.f32 %v113, %v114
      %s116 = vtos %v115
      %s117 = smul.f32 %s116, 0.001953125
      %s118 = scalar_lea.smem [#allocation13], 0
      %119 = sst [smem:[%s118]] %s117
      %v120 = vld [vmem:[%s3] sm:$0xff]
      %v121 = vld [vmem:[#allocation10] sm:$0xff]
      %v122 = vcvt.s32.f32 %v121
      %v123 = vsub.f32 %v120, %v122
      %v124 = vand.u32 2147483647, %v123
      %125 = vadd.xlane.f32.xlu0 %v124
      %v126 = vpop.xlane.xlu0 %125
      %v127 = vrot.slane %v126, 4
      %v128 = vadd.f32 %v126, %v127
      %v129 = vrot.slane %v128, 2
      %v130 = vadd.f32 %v128, %v129
      %v131 = vrot.slane %v130, 1
      %v132 = vadd.f32 %v130, %v131
      %s133 = vtos %v132
      %s134 = smul.f32 %s133, 0.0625
      %s135 = scalar_lea.smem [#allocation15], 0
      %136 = sst [smem:[%s135]] %s134
    $region45: #{tpu_custom_call.1} parent=1 // pred_fallthru
      _
    // Predicated region
    $region46: #{tpu_custom_call.1} parent=1 // pred_check
      _
    $region47: #{tpu_custom_call.1} parent=1 // pred_check_branch
      %138 = sbr.rel (0) target = $region49
    $region48: #{tpu_custom_call.1} parent=1 // pred_region
      %s140 = ssub.s32 16, 16
      %141 = vsyncadd [#allocation6], %s140
      %144 = dma.smem_to_hbm [#allocation12], 16, %s5, [#allocation6]
    $region49: #{tpu_custom_call.1} parent=1 // pred_fallthru
      _
    // Predicated region
    $region50: #{tpu_custom_call.1} parent=1 // pred_check
      _
    $region51: #{tpu_custom_call.1} parent=1 // pred_check_branch
      %146 = sbr.rel (0) target = $region53
    $region52: #{tpu_custom_call.1} parent=1 // pred_region
      %s148 = ssub.s32 16, 16
      %149 = vsyncadd [#allocation14], %s148
      %152 = dma.smem_to_hbm [#allocation13], 16, %s6, [#allocation14]
    $region53: #{tpu_custom_call.1} parent=1 // pred_fallthru
      _
    // Predicated region
    $region54: #{tpu_custom_call.1} parent=1 // pred_check
      _
    $region55: #{tpu_custom_call.1} parent=1 // pred_check_branch
      %154 = sbr.rel (0) target = $region57
    $region56: #{tpu_custom_call.1} parent=1 // pred_region
      %s156 = ssub.s32 16, 16
      %157 = vsyncadd [#allocation14], %s156
      %160 = dma.smem_to_hbm [#allocation15], 16, %s7, [#allocation14]
    $region57: #{tpu_custom_call.1} parent=1 // pred_fallthru
      _
    // Predicated region
    $region58: #{tpu_custom_call.1} parent=1 // pred_check
      _
    $region59: #{tpu_custom_call.1} parent=1 // pred_check_branch
      %162 = sbr.rel (0) target = $region61
    $region60: #{tpu_custom_call.1} parent=1 // pred_region
      %163 = dma.done [#allocation6], 16
    $region61: #{tpu_custom_call.1} parent=1 // pred_fallthru
      _
    // Predicated region
    $region62: #{tpu_custom_call.1} parent=1 // pred_check
      _
    $region63: #{tpu_custom_call.1} parent=1 // pred_check_branch
      %165 = sbr.rel (0) target = $region65
    $region64: #{tpu_custom_call.1} parent=1 // pred_region
      %166 = dma.done [#allocation14], 16
    $region65: #{tpu_custom_call.1} parent=1 // pred_fallthru
      _
    // Predicated region
    $region66: #{tpu_custom_call.1} parent=1 // pred_check
      _
    $region67: #{tpu_custom_call.1} parent=1 // pred_check_branch
      %168 = sbr.rel (0) target = $region69
    $region68: #{tpu_custom_call.1} parent=1 // pred_region
      %169 = dma.done [#allocation14], 16
    $region69: #{tpu_custom_call.1} parent=1 // pred_fallthru
      _
    %170 = sfence
    %171 = vsyncpa [#allocation5], 1
    %172 = vsyncpa [#allocation8], 1
    %173 = vsyncpa [#allocation11], 1
    %174 = vsyncpa [#allocation6], 1
    %175 = vsyncpa [#allocation14], 1

</llo_original>
